<compile_context>
chip_gen: v7x
topology: tpu7x:2x2x1
jax: 0.10.0
libtpu: 0.0.40
codegen_flags: <defaults>
</compile_context>

<pallas_src>
import jax
import jax.numpy as jnp
from jax.experimental import pallas as pl
from jax.experimental.pallas import tpu as pltpu


def _round_up(v, m):
    return (v + m - 1) // m * m


# ----------------------------- kernel ---------------------------------------
def face_classifier_kernel(x_ref, wb_ref, bb_ref, w1_ref, b1_ref,
                           w2_ref, b2_ref, out_ref, acc_ref):
    """Grid = (batch_tiles, k_tiles).  acc_ref: (TM, E) f32 embedding accumulator."""
    k = pl.program_id(1)

    # ---- init accumulator with the broadcast base bias (saves an epilogue add) ----
    @pl.when(k == 0)
    def _():
        acc_ref[...] = jnp.broadcast_to(bb_ref[...], acc_ref.shape)

    # ---- base_model: K-tiled embedding matmul (bf16 in, f32 acc) ------------------
    acc_ref[...] += jnp.dot(x_ref[...], wb_ref[...],
                            preferred_element_type=jnp.float32)

    # ---- epilogue: fc head, only once per batch tile -------------------------------
    @pl.when(k == pl.num_programs(1) - 1)
    def _():
        emb = acc_ref[...]                                     # (TM, E) f32 (bias included)

        # fc[0]: Linear(E, 512)  +  fc[1]: ReLU
        h = jnp.dot(emb.astype(jnp.bfloat16), w1_ref[...],
                    preferred_element_type=jnp.float32) + b1_ref[...]
        h = jnp.maximum(h, 0.0)

        # fc[2]: Dropout(0.5) — identity in eval mode (deterministic forward)
        # TODO(synk): training-mode dropout would use pltpu.prng_seed /
        #             pltpu.prng_random_bits with 2x keep-scaling.

        # fc[3]: Linear(512, num_classes)  (lane-padded to 128 columns)
        out = jnp.dot(h.astype(jnp.bfloat16), w2_ref[...],
                      preferred_element_type=jnp.float32) + b2_ref[...]
        out_ref[...] = out.astype(out_ref.dtype)


# --------------------------- param packing ----------------------------------
def pack_params(params, d_in, *, tk=2048):
    """One-time packing: bf16 cast + padding of weights (hoisted out of the
    per-call path).  Returns (packed_dict, meta_dict)."""
    wb, bb, w1, b1, w2, b2 = params
    E = wb.shape[1]
    HID = w1.shape[1]
    NC = w2.shape[1]

    TK = min(tk, _round_up(d_in, 128))        # reduction tile over flattened input
    D_pad = _round_up(d_in, TK)
    NC_pad = _round_up(NC, 128)               # lane-dense output store

    wb_b = wb.astype(jnp.bfloat16)
    if D_pad != d_in:
        wb_p = jnp.zeros((D_pad, E), jnp.bfloat16).at[:d_in, :].set(wb_b)
    else:
        wb_p = wb_b

    w2_b = w2.astype(jnp.bfloat16)
    if NC_pad != NC:
        w2_p = jnp.zeros((HID, NC_pad), jnp.bfloat16).at[:, :NC].set(w2_b)
        b2_p = jnp.zeros((1, NC_pad), jnp.float32).at[:, :NC].set(b2.astype(jnp.float32))
    else:
        w2_p = w2_b
        b2_p = b2.astype(jnp.float32)

    packed = dict(
        wb=wb_p,
        bb=bb.astype(jnp.float32),
        w1=w1.astype(jnp.bfloat16),
        b1=b1.astype(jnp.float32),
        w2=w2_p,
        b2=b2_p,
    )
    meta = dict(d_in=d_in, num_classes=NC, tk=TK)
    return packed, meta


# ------------------------------ forward -------------------------------------
def face_classifier_forward(x_nchw, packed, meta, *, max_tm=256):
    """x_nchw: (B, C, H, W) float32.  packed/meta from pack_params().

    max_tm: batch-tile cap.  On single-TC v5e/v6e keep it large (256+) to minimize
    backbone-weight re-streaming; on v7x pick max_tm <= B_pad//2 so the "parallel"
    batch axis keeps >=2 tiles for megacore sharding (for B <= max_tm the second
    TC idles, which is accepted here)."""
    wb_p = packed["wb"]
    bb, w1, b1 = packed["bb"], packed["w1"], packed["b1"]
    w2_p, b2_p = packed["w2"], packed["b2"]

    B = x_nchw.shape[0]
    D_in = meta["d_in"]
    NC = meta["num_classes"]
    TK = meta["tk"]

    D_pad, E = wb_p.shape
    HID, NC_pad = w2_p.shape

    # --- batch tiling (bf16 sublane packing: multiple of 16) ---------------------
    TM = min(max_tm, _round_up(B, 16))
    B_pad = _round_up(B, TM)

    # --- flatten + (conditional) zero-pad of the activation ----------------------
    x_flat = x_nchw.reshape(B, -1).astype(jnp.bfloat16)
    if (B_pad, D_pad) != (B, D_in):
        x_p = jnp.zeros((B_pad, D_pad), jnp.bfloat16).at[:B, :D_in].set(x_flat)
    else:
        x_p = x_flat

    grid = (B_pad // TM, D_pad // TK)         # (batch "parallel", K "arbitrary")

    # --- explicit VMEM budget: 2x streamed tiles + resident head + acc + out -----
    need = (2 * (TM * TK + TK * E) * 2                    # x / wb double-buffers (bf16)
            + TM * E * 4                                  # f32 accumulator
            + 2 * (E * HID + HID * NC_pad) * 2            # head weights (double-buffered bf16)
            + 2 * (E + HID + NC_pad) * 4                  # biases (f32)
            + 2 * TM * NC_pad * 4)                        # output double-buffer (f32)
    vmem_limit = int(min(max(need + (8 << 20), 32 << 20), 64 << 20))

    out = pl.pallas_call(
        face_classifier_kernel,
        out_shape=jax.ShapeDtypeStruct((B_pad, NC_pad), jnp.float32),
        grid=grid,
        in_specs=[
            pl.BlockSpec((TM, TK), lambda i, k: (i, k)),        # x tile (streamed)
            pl.BlockSpec((TK, E), lambda i, k: (k, 0)),         # W_base (K-tiled, streamed)
            pl.BlockSpec((1, E), lambda i, k: (0, 0)),          # b_base (f32)
            pl.BlockSpec((E, HID), lambda i, k: (0, 0)),        # W1 (resident)
            pl.BlockSpec((1, HID), lambda i, k: (0, 0)),        # b1 (f32)
            pl.BlockSpec((HID, NC_pad), lambda i, k: (0, 0)),   # W2 (lane-padded)
            pl.BlockSpec((1, NC_pad), lambda i, k: (0, 0)),     # b2 (lane-padded)
        ],
        out_specs=pl.BlockSpec((TM, NC_pad), lambda i, k: (i, 0)),
        scratch_shapes=[pltpu.VMEM((TM, E), jnp.float32)],      # embedding accumulator
        compiler_params=pltpu.CompilerParams(
            dimension_semantics=("parallel", "arbitrary"),
            vmem_limit_bytes=vmem_limit),
    )(x_p, wb_p, bb, w1, b1, w2_p, b2_p)

    return out[:B, :NC]


# ------------------------------ helpers --------------------------------------
def init_params(key, d_in, embedding_dim, hidden, num_classes):
    k = jax.random.split(key, 6)
    scale_b = 1.0 / jnp.sqrt(d_in)
    scale_1 = 1.0 / jnp.sqrt(embedding_dim)
    scale_2 = 1.0 / jnp.sqrt(hidden)
    wb = jax.random.uniform(k[0], (d_in, embedding_dim), jnp.float32, -scale_b, scale_b)
    bb = jax.random.uniform(k[1], (1, embedding_dim), jnp.float32, -scale_b, scale_b)
    w1 = jax.random.uniform(k[2], (embedding_dim, hidden), jnp.float32, -scale_1, scale_1)
    b1 = jax.random.uniform(k[3], (1, hidden), jnp.float32, -scale_1, scale_1)
    w2 = jax.random.uniform(k[4], (hidden, num_classes), jnp.float32, -scale_2, scale_2)
    b2 = jax.random.uniform(k[5], (1, num_classes), jnp.float32, -scale_2, scale_2)
    return (wb, bb, w1, b1, w2, b2)


def reference_forward(x_nchw, params):
    """Pure-JAX f32 reference matching the PyTorch module (eval mode)."""
    wb, bb, w1, b1, w2, b2 = params
    B = x_nchw.shape[0]
    x = x_nchw.reshape(B, -1)
    emb = x @ wb + bb
    h = jnp.maximum(emb @ w1 + b1, 0.0)
    return h @ w2 + b2


if __name__ == "__main__":
    B, C, H, W = 2, 4, 16, 16
    embedding_dim = 128
    hidden = 512          # fixed by the module definition
    num_classes = 16

    key = jax.random.PRNGKey(0)
    kx, kp = jax.random.split(key)
    x = jax.random.normal(kx, (B, C, H, W), jnp.float32)
    params = init_params(kp, C * H * W, embedding_dim, hidden, num_classes)

    # One-time param packing (bf16 cast + padding hoisted out of the forward path).
    packed, meta = pack_params(params, C * H * W, tk=2048)

    out = face_classifier_forward(x, packed, meta)
    out = jax.block_until_ready(out)

    ref = reference_forward(x, params)
    assert out.shape == (B, num_classes)
    # bf16 weights/activations with f32 accumulation vs. the f32 reference:
    # tolerance loosened accordingly (observed error ~1e-3 at these shapes).
    assert jnp.allclose(out, ref, atol=2e-2, rtol=2e-2), \
        float(jnp.max(jnp.abs(out - ref)))

    print("KERNEL_OK")
</pallas_src>

<mosaic_0001>
module attributes {stable_mosaic.version = 11 : i64} {
  func.func @face_classifier_kernel(%arg0: i32, %arg1: i32, %arg2: memref<16x1024xbf16, #tpu.memory_space<vmem>>, %arg3: memref<1024x128xbf16, #tpu.memory_space<vmem>>, %arg4: memref<1x128xf32, #tpu.memory_space<vmem>>, %arg5: memref<128x512xbf16, #tpu.memory_space<vmem>>, %arg6: memref<1x512xf32, #tpu.memory_space<vmem>>, %arg7: memref<512x128xbf16, #tpu.memory_space<vmem>>, %arg8: memref<1x128xf32, #tpu.memory_space<vmem>>, %arg9: memref<16x128xf32, #tpu.memory_space<vmem>>, %arg10: memref<16x128xf32, #tpu.memory_space<vmem>>) attributes {dimension_semantics = [#tpu.dimension_semantics<parallel>, #tpu.dimension_semantics<arbitrary>], iteration_bounds = array<i64: 1, 1>, scalar_prefetch = 0 : i64, scratch_operands = 1 : i64, tpu.core_type = #tpu.core_type<tc>, window_params = [{transform_indices = @transform_0, window_bounds = array<i64: 16, 1024>}, {transform_indices = @transform_1, window_bounds = array<i64: 1024, 128>}, {pipeline_mode = #tpu.pipeline_mode<synchronous>, transform_indices = @transform_2, window_bounds = array<i64: 1, 128>}, {pipeline_mode = #tpu.pipeline_mode<synchronous>, transform_indices = @transform_3, window_bounds = array<i64: 128, 512>}, {pipeline_mode = #tpu.pipeline_mode<synchronous>, transform_indices = @transform_4, window_bounds = array<i64: 1, 512>}, {pipeline_mode = #tpu.pipeline_mode<synchronous>, transform_indices = @transform_5, window_bounds = array<i64: 512, 128>}, {pipeline_mode = #tpu.pipeline_mode<synchronous>, transform_indices = @transform_6, window_bounds = array<i64: 1, 128>}, {transform_indices = @transform_7, window_bounds = array<i64: 16, 128>}]} {
    %c0_i32 = arith.constant 0 : i32
    %0 = arith.cmpi eq, %arg1, %c0_i32 : i32
    %1 = arith.extui %0 : i1 to i32
    %c0_i32_0 = arith.constant 0 : i32
    %2 = arith.cmpi ne, %1, %c0_i32_0 : i32
    scf.if %2 {
      %c0_10 = arith.constant 0 : index
      %c0_11 = arith.constant 0 : index
      %12 = vector.load %arg4[%c0_10, %c0_11] : memref<1x128xf32, #tpu.memory_space<vmem>>, vector<1x128xf32>
      %13 = vector.shape_cast %12 : vector<1x128xf32> to vector<1x128xf32>
      %14 = vector.broadcast %13 : vector<1x128xf32> to vector<16x128xf32>
      %c0_12 = arith.constant 0 : index
      %c0_13 = arith.constant 0 : index
      %15 = vector.load %arg10[%c0_12, %c0_13] : memref<16x128xf32, #tpu.memory_space<vmem>>, vector<16x128xf32>
      tpu.vector_store %arg10[%c0_12, %c0_13], %14 {strides = array<i32>} : memref<16x128xf32, #tpu.memory_space<vmem>>, vector<16x128xf32>,
    } else {
    }
    %c0 = arith.constant 0 : index
    %c0_1 = arith.constant 0 : index
    %3 = vector.load %arg10[%c0, %c0_1] : memref<16x128xf32, #tpu.memory_space<vmem>>, vector<16x128xf32>
    %c0_2 = arith.constant 0 : index
    %c0_3 = arith.constant 0 : index
    %4 = vector.load %arg2[%c0_2, %c0_3] : memref<16x1024xbf16, #tpu.memory_space<vmem>>, vector<16x1024xbf16>
    %c0_4 = arith.constant 0 : index
    %c0_5 = arith.constant 0 : index
    %5 = vector.load %arg3[%c0_4, %c0_5] : memref<1024x128xbf16, #tpu.memory_space<vmem>>, vector<1024x128xbf16>
    %cst = arith.constant dense<0.000000e+00> : vector<16x128xf32>
    %6 = tpu.matmul %4, %5, %cst {dimension_numbers = #tpu.dot_dimension_numbers<[1], [0], [0], [1], [0, 0, 1, 1], [], []>} : vector<16x1024xbf16>, vector<1024x128xbf16>, vector<16x128xf32> -> vector<16x128xf32>
    %7 = arith.addf %3, %6 : vector<16x128xf32>
    %c0_6 = arith.constant 0 : index
    %c0_7 = arith.constant 0 : index
    %8 = vector.load %arg10[%c0_6, %c0_7] : memref<16x128xf32, #tpu.memory_space<vmem>>, vector<16x128xf32>
    tpu.vector_store %arg10[%c0_6, %c0_7], %7 {strides = array<i32>} : memref<16x128xf32, #tpu.memory_space<vmem>>, vector<16x128xf32>,
    %c0_i32_8 = arith.constant 0 : i32
    %9 = arith.cmpi eq, %arg1, %c0_i32_8 : i32
    %10 = arith.extui %9 : i1 to i32
    %c0_i32_9 = arith.constant 0 : i32
    %11 = arith.cmpi ne, %10, %c0_i32_9 : i32
    scf.if %11 {
      %c0_10 = arith.constant 0 : index
      %c0_11 = arith.constant 0 : index
      %12 = vector.load %arg10[%c0_10, %c0_11] : memref<16x128xf32, #tpu.memory_space<vmem>>, vector<16x128xf32>
      %13 = arith.truncf %12 : vector<16x128xf32> to vector<16x128xbf16>
      %c0_12 = arith.constant 0 : index
      %c0_13 = arith.constant 0 : index
      %14 = vector.load %arg5[%c0_12, %c0_13] : memref<128x512xbf16, #tpu.memory_space<vmem>>, vector<128x512xbf16>
      %cst_14 = arith.constant dense<0.000000e+00> : vector<16x512xf32>
      %15 = tpu.matmul %13, %14, %cst_14 {dimension_numbers = #tpu.dot_dimension_numbers<[1], [0], [0], [1], [0, 0, 1, 1], [], []>} : vector<16x128xbf16>, vector<128x512xbf16>, vector<16x512xf32> -> vector<16x512xf32>
      %c0_15 = arith.constant 0 : index
      %c0_16 = arith.constant 0 : index
      %16 = vector.load %arg6[%c0_15, %c0_16] : memref<1x512xf32, #tpu.memory_space<vmem>>, vector<1x512xf32>
      %17 = vector.broadcast %16 : vector<1x512xf32> to vector<16x512xf32>
      %18 = arith.addf %15, %17 : vector<16x512xf32>
      %cst_17 = arith.constant 0.000000e+00 : f32
      %19 = vector.broadcast %cst_17 : f32 to vector<16x512xf32>
      %20 = arith.maximumf %18, %19 : vector<16x512xf32>
      %21 = arith.truncf %20 : vector<16x512xf32> to vector<16x512xbf16>
      %c0_18 = arith.constant 0 : index
      %c0_19 = arith.constant 0 : index
      %22 = vector.load %arg7[%c0_18, %c0_19] : memref<512x128xbf16, #tpu.memory_space<vmem>>, vector<512x128xbf16>
      %cst_20 = arith.constant dense<0.000000e+00> : vector<16x128xf32>
      %23 = tpu.matmul %21, %22, %cst_20 {dimension_numbers = #tpu.dot_dimension_numbers<[1], [0], [0], [1], [0, 0, 1, 1], [], []>} : vector<16x512xbf16>, vector<512x128xbf16>, vector<16x128xf32> -> vector<16x128xf32>
      %c0_21 = arith.constant 0 : index
      %c0_22 = arith.constant 0 : index
      %24 = vector.load %arg8[%c0_21, %c0_22] : memref<1x128xf32, #tpu.memory_space<vmem>>, vector<1x128xf32>
      %25 = vector.broadcast %24 : vector<1x128xf32> to vector<16x128xf32>
      %26 = arith.addf %23, %25 : vector<16x128xf32>
      %c0_23 = arith.constant 0 : index
      %c0_24 = arith.constant 0 : index
      %27 = vector.load %arg9[%c0_23, %c0_24] : memref<16x128xf32, #tpu.memory_space<vmem>>, vector<16x128xf32>
      tpu.vector_store %arg9[%c0_23, %c0_24], %26 {strides = array<i32>} : memref<16x128xf32, #tpu.memory_space<vmem>>, vector<16x128xf32>,
    } else {
    }
    return
  }
  func.func @transform_0(%arg0: i32, %arg1: i32) -> (i32, i32) {
    %c0_i32 = arith.constant 0 : i32
    return %arg0, %arg1 : i32, i32
  }
  func.func @transform_1(%arg0: i32, %arg1: i32) -> (i32, i32) {
    %c0_i32 = arith.constant 0 : i32
    %c0_i32_0 = arith.constant 0 : i32
    return %arg1, %c0_i32 : i32, i32
  }
  func.func @transform_2(%arg0: i32, %arg1: i32) -> (i32, i32) {
    %c0_i32 = arith.constant 0 : i32
    %c0_i32_0 = arith.constant 0 : i32
    %c0_i32_1 = arith.constant 0 : i32
    return %c0_i32, %c0_i32_0 : i32, i32
  }
  func.func @transform_3(%arg0: i32, %arg1: i32) -> (i32, i32) {
    %c0_i32 = arith.constant 0 : i32
    %c0_i32_0 = arith.constant 0 : i32
    %c0_i32_1 = arith.constant 0 : i32
    return %c0_i32, %c0_i32_0 : i32, i32
  }
  func.func @transform_4(%arg0: i32, %arg1: i32) -> (i32, i32) {
    %c0_i32 = arith.constant 0 : i32
    %c0_i32_0 = arith.constant 0 : i32
    %c0_i32_1 = arith.constant 0 : i32
    return %c0_i32, %c0_i32_0 : i32, i32
  }
  func.func @transform_5(%arg0: i32, %arg1: i32) -> (i32, i32) {
    %c0_i32 = arith.constant 0 : i32
    %c0_i32_0 = arith.constant 0 : i32
    %c0_i32_1 = arith.constant 0 : i32
    return %c0_i32, %c0_i32_0 : i32, i32
  }
  func.func @transform_6(%arg0: i32, %arg1: i32) -> (i32, i32) {
    %c0_i32 = arith.constant 0 : i32
    %c0_i32_0 = arith.constant 0 : i32
    %c0_i32_1 = arith.constant 0 : i32
    return %c0_i32, %c0_i32_0 : i32, i32
  }
  func.func @transform_7(%arg0: i32, %arg1: i32) -> (i32, i32) {
    %c0_i32 = arith.constant 0 : i32
    %c0_i32_0 = arith.constant 0 : i32
    return %arg0, %c0_i32 : i32, i32
  }
}

</mosaic_0001>

<llo_original>
// kernel: tpu_custom_call.1
$region0: #{tpu_custom_call.1}
  #allocation0 [shape = 'u32[]', space=smem, size = 0x4, offset = 0x4, fixed_abs, tag = 'smem constant byte address 0x4 - core index']
  #allocation1 [shape = 'u32[144,128]{1,0:T(1,128)}', space=vmem, size = 0x12000, scoped, tag = 'internal scratch']
  #allocation2 [shape = 'f32[16,128]{1,0:T(8,128)}', space=vmem, size = 0x2000, scoped, tag = 'scratch operand']
  %s0 = inlined_call_operand.hbm [shape: bf16[16,1024], index: 0, kind: input, shape index: {}]
  %s1 = inlined_call_operand.hbm [shape: bf16[1024,128], index: 1, kind: input, shape index: {}]
  %s2 = inlined_call_operand.vmem [shape: f32[1,128], index: 2, kind: input, shape index: {}]
  %s3 = inlined_call_operand.hbm [shape: bf16[128,512], index: 3, kind: input, shape index: {}]
  %s4 = inlined_call_operand.vmem [shape: f32[1,512], index: 4, kind: input, shape index: {}]
  %s5 = inlined_call_operand.hbm [shape: bf16[512,128], index: 5, kind: input, shape index: {}]
  %s6 = inlined_call_operand.vmem [shape: f32[1,128], index: 6, kind: input, shape index: {}]
  %s7 = inlined_call_operand.hbm [shape: f32[16,128], index: 7, kind: output, shape index: {}]
  %s8 = sld [smem:[#allocation0]]
  $region62: #{tpu_custom_call.1} parent=0
    _
  %s10 = ssub.s32 1, %s8
  %s11 = scalar_select 0, %s10, %s8
  $region1: #{tpu_custom_call.1} parent=0
    #allocation3 [shape = 'u8[32768]{0}', space=vmem, size = 0x8000, scoped, tag = 'input window, operand 0, single buffered']
    #allocation4 [shape = 's32[1]{0}', space=sflag, size = 0x4, scoped, tag = 'scoped memory for tpu_custom_call.1']
    #allocation5 [shape = 's32[1]{0}', space=sflag, size = 0x4, scoped, tag = 'scoped memory for tpu_custom_call.1']
    #allocation6 [shape = 'u8[262144]{0}', space=vmem, size = 0x40000, scoped, tag = 'input window, operand 1, single buffered']
    #allocation7 [shape = 's32[1]{0}', space=sflag, size = 0x4, scoped, tag = 'scoped memory for tpu_custom_call.1']
    #allocation8 [shape = 'u8[131072]{0}', space=vmem, size = 0x20000, scoped, tag = 'input window, operand 3, single buffered']
    #allocation9 [shape = 'u8[131072]{0}', space=vmem, size = 0x20000, scoped, tag = 'input window, operand 5, single buffered']
    #allocation10 [shape = 's32[1]{0}', space=sflag, size = 0x4, scoped, tag = 'scoped memory for tpu_custom_call.1']
    #allocation11 [shape = 'u8[8192]{0}', space=vmem, size = 0x2000, scoped, tag = 'output window, operand 0, single buffered']
    %12 = vsyncpa [#allocation4], 0
    %13 = vsyncpa [#allocation7], 0
    %14 = vsyncpa [#allocation10], 0
    %15 = vsyncpa [#allocation5], 0
    // Predicated region
    $region2: #{tpu_custom_call.1} parent=1 // pred_check
      _
    $region3: #{tpu_custom_call.1} parent=1 // pred_check_branch
      %17 = sbr.rel (0) target = $region5
    $region4: #{tpu_custom_call.1} parent=1 // pred_region
      %s19 = ssub.s32 1024, 1024
      %20 = vsyncadd [#allocation4], %s19
      %s21 = sshll.u32 [#allocation3], 4
      %s22 = int_to_ptr.vmem [resolvable:$true] %s21
      %27 = dma.hbm_to_vmem [thread:$0]  %s0, 1024, %s22, [#allocation4], 512, 512, 32
    $region5: #{tpu_custom_call.1} parent=1 // pred_fallthru
      _
    // Predicated region
    $region6: #{tpu_custom_call.1} parent=1 // pred_check
      _
    $region7: #{tpu_custom_call.1} parent=1 // pred_check_branch
      %29 = sbr.rel (0) target = $region9
    $region8: #{tpu_custom_call.1} parent=1 // pred_region
      %s31 = ssub.s32 8192, 8192
      %32 = vsyncadd [#allocation7], %s31
      %s33 = sshll.u32 [#allocation6], 4
      %s34 = int_to_ptr.vmem [resolvable:$true] %s33
      %39 = dma.hbm_to_vmem [thread:$0]  %s1, 8192, %s34, [#allocation7], 64, 64, 4
    $region9: #{tpu_custom_call.1} parent=1 // pred_fallthru
      _
    // Predicated region
    $region10: #{tpu_custom_call.1} parent=1 // pred_check
      _
    $region11: #{tpu_custom_call.1} parent=1 // pred_check_branch
      %41 = sbr.rel (0) target = $region13
    $region12: #{tpu_custom_call.1} parent=1 // pred_region
      _
    $region13: #{tpu_custom_call.1} parent=1 // pred_fallthru
      _
    // Predicated region
    $region14: #{tpu_custom_call.1} parent=1 // pred_check
      _
    $region15: #{tpu_custom_call.1} parent=1 // pred_check_branch
      %43 = sbr.rel (0) target = $region17
    $region16: #{tpu_custom_call.1} parent=1 // pred_region
      %s45 = ssub.s32 4096, 4096
      %46 = vsyncadd [#allocation7], %s45
      %s47 = sshll.u32 [#allocation8], 4
      %s48 = int_to_ptr.vmem [resolvable:$true] %s47
      %53 = dma.hbm_to_vmem [thread:$0]  %s3, 4096, %s48, [#allocation7], 256, 256, 16
    $region17: #{tpu_custom_call.1} parent=1 // pred_fallthru
      _
    // Predicated region
    $region18: #{tpu_custom_call.1} parent=1 // pred_check
      _
    $region19: #{tpu_custom_call.1} parent=1 // pred_check_branch
      %55 = sbr.rel (0) target = $region21
    $region20: #{tpu_custom_call.1} parent=1 // pred_region
      _
    $region21: #{tpu_custom_call.1} parent=1 // pred_fallthru
      _
    // Predicated region
    $region22: #{tpu_custom_call.1} parent=1 // pred_check
      _
    $region23: #{tpu_custom_call.1} parent=1 // pred_check_branch
      %57 = sbr.rel (0) target = $region25
    $region24: #{tpu_custom_call.1} parent=1 // pred_region
      %s59 = ssub.s32 4096, 4096
      %60 = vsyncadd [#allocation10], %s59
      %s61 = sshll.u32 [#allocation9], 4
      %s62 = int_to_ptr.vmem [resolvable:$true] %s61
      %67 = dma.hbm_to_vmem [thread:$0]  %s5, 4096, %s62, [#allocation10], 64, 64, 4
    $region25: #{tpu_custom_call.1} parent=1 // pred_fallthru
      _
    // Predicated region
    $region26: #{tpu_custom_call.1} parent=1 // pred_check
      _
    $region27: #{tpu_custom_call.1} parent=1 // pred_check_branch
      %69 = sbr.rel (0) target = $region29
    $region28: #{tpu_custom_call.1} parent=1 // pred_region
      _
    $region29: #{tpu_custom_call.1} parent=1 // pred_fallthru
      _
    // Predicated region
    $region30: #{tpu_custom_call.1} parent=1 // pred_check
      _
    $region31: #{tpu_custom_call.1} parent=1 // pred_check_branch
      %71 = sbr.rel (0) target = $region33
    $region32: #{tpu_custom_call.1} parent=1 // pred_region
      %72 = dma.done [#allocation4], 1024
    $region33: #{tpu_custom_call.1} parent=1 // pred_fallthru
      _
    // Predicated region
    $region34: #{tpu_custom_call.1} parent=1 // pred_check
      _
    $region35: #{tpu_custom_call.1} parent=1 // pred_check_branch
      %74 = sbr.rel (0) target = $region37
    $region36: #{tpu_custom_call.1} parent=1 // pred_region
      %75 = dma.done [#allocation7], 8192
    $region37: #{tpu_custom_call.1} parent=1 // pred_fallthru
      _
    // Predicated region
    $region38: #{tpu_custom_call.1} parent=1 // pred_check
      _
    $region39: #{tpu_custom_call.1} parent=1 // pred_check_branch
      %77 = sbr.rel (0) target = $region41
    $region40: #{tpu_custom_call.1} parent=1 // pred_region
      %78 = dma.done [#allocation7], 4096
    $region41: #{tpu_custom_call.1} parent=1 // pred_fallthru
      _
    // Predicated region
    $region42: #{tpu_custom_call.1} parent=1 // pred_check
      _
    $region43: #{tpu_custom_call.1} parent=1 // pred_check_branch
      %80 = sbr.rel (0) target = $region45
    $region44: #{tpu_custom_call.1} parent=1 // pred_region
      %81 = dma.done [#allocation10], 4096
    $region45: #{tpu_custom_call.1} parent=1 // pred_fallthru
      _
    %p83 = scmp.eq.s32.totalorder 0, 0
    // Predicated region
    $region46: #{tpu_custom_call.1} parent=1 // pred_check
      %p84 = pneg %p83
    $region47: #{tpu_custom_call.1} parent=1 // pred_check_branch
      %86 = sbr.rel (%p84) target = $region49
    $region48: #{tpu_custom_call.1} parent=1 // pred_region
      %v87 = vld [vmem:[%s2] sm:$0x1]
      %v89 = vlaneseq
      %v90 = vshrl.u32 %v89, 7
      %v91 = vsub.s32 0, %v90
      %v92 = vrot.slane %v87, %v91
      %94 = vst [vmem:[#allocation2] sm:$0xff] %v92
      %95 = vst [vmem:[#allocation2 + $0x8] sm:$0xff] %v92
    $region49: #{tpu_custom_call.1} parent=1 // pred_fallthru
      _
    %v96 = vld [vmem:[#allocation2] sm:$0xff]
    %v97 = vld [vmem:[#allocation2 + $0x8] sm:$0xff]
    %v98 = vld [vmem:[#allocation3] sm:$0xff]
    %v99 = vld [vmem:[#allocation3 + $0x8] sm:$0xff]
    %v100 = vld [vmem:[#allocation3 + $0x10] sm:$0xff]
    %v101 = vld [vmem:[#allocation3 + $0x18] sm:$0xff]
    %v102 = vld [vmem:[#allocation3 + $0x20] sm:$0xff]
    %v103 = vld [vmem:[#allocation3 + $0x28] sm:$0xff]
    %v104 = vld [vmem:[#allocation3 + $0x30] sm:$0xff]
    %v105 = vld [vmem:[#allocation3 + $0x38] sm:$0xff]
    %v106 = vld [vmem:[#allocation6] sm:$0xf]
    %v107 = vld [vmem:[#allocation6 + $0x4] sm:$0xf]
    %v108 = vld [vmem:[#allocation6 + $0x8] sm:$0xf]
    %v109 = vld [vmem:[#allocation6 + $0xc] sm:$0xf]
    %v110 = vld [vmem:[#allocation6 + $0x10] sm:$0xf]
    %v111 = vld [vmem:[#allocation6 + $0x14] sm:$0xf]
    %v112 = vld [vmem:[#allocation6 + $0x18] sm:$0xf]
    %v113 = vld [vmem:[#allocation6 + $0x1c] sm:$0xf]
    %v114 = vld [vmem:[#allocation6 + $0x20] sm:$0xf]
    %v115 = vld [vmem:[#allocation6 + $0x24] sm:$0xf]
    %v116 = vld [vmem:[#allocation6 + $0x28] sm:$0xf]
    %v117 = vld [vmem:[#allocation6 + $0x2c] sm:$0xf]
    %v118 = vld [vmem:[#allocation6 + $0x30] sm:$0xf]
    %v119 = vld [vmem:[#allocation6 + $0x34] sm:$0xf]
    %v120 = vld [vmem:[#allocation6 + $0x38] sm:$0xf]
    %v121 = vld [vmem:[#allocation6 + $0x3c] sm:$0xf]
    %v122 = vld [vmem:[#allocation6 + $0x40] sm:$0xf]
    %v123 = vld [vmem:[#allocation6 + $0x44] sm:$0xf]
    %v124 = vld [vmem:[#allocation6 + $0x48] sm:$0xf]
    %v125 = vld [vmem:[#allocation6 + $0x4c] sm:$0xf]
    %v126 = vld [vmem:[#allocation6 + $0x50] sm:$0xf]
    %v127 = vld [vmem:[#allocation6 + $0x54] sm:$0xf]
    %v128 = vld [vmem:[#allocation6 + $0x58] sm:$0xf]
    %v129 = vld [vmem:[#allocation6 + $0x5c] sm:$0xf]
    %v130 = vld [vmem:[#allocation6 + $0x60] sm:$0xf]
    %v131 = vld [vmem:[#allocation6 + $0x64] sm:$0xf]
    %v132 = vld [vmem:[#allocation6 + $0x68] sm:$0xf]
    %v133 = vld [vmem:[#allocation6 + $0x6c] sm:$0xf]
    %v134 = vld [vmem:[#allocation6 + $0x70] sm:$0xf]
    %v135 = vld [vmem:[#allocation6 + $0x74] sm:$0xf]
    %v136 = vld [vmem:[#allocation6 + $0x78] sm:$0xf]
    %v137 = vld [vmem:[#allocation6 + $0x7c] sm:$0xf]
    %v138 = vld [vmem:[#allocation6 + $0x80] sm:$0xf]
    %v139 = vld [vmem:[#allocation6 + $0x84] sm:$0xf]
    %v140 = vld [vmem:[#allocation6 + $0x88] sm:$0xf]
    %v141 = vld [vmem:[#allocation6 + $0x8c] sm:$0xf]
    %v142 = vld [vmem:[#allocation6 + $0x90] sm:$0xf]
    %v143 = vld [vmem:[#allocation6 + $0x94] sm:$0xf]
    %v144 = vld [vmem:[#allocation6 + $0x98] sm:$0xf]
    %v145 = vld [vmem:[#allocation6 + $0x9c] sm:$0xf]
    %v146 = vld [vmem:[#allocation6 + $0xa0] sm:$0xf]
    %v147 = vld [vmem:[#allocation6 + $0xa4] sm:$0xf]
    %v148 = vld [vmem:[#allocation6 + $0xa8] sm:$0xf]
    %v149 = vld [vmem:[#allocation6 + $0xac] sm:$0xf]
    %v150 = vld [vmem:[#allocation6 + $0xb0] sm:$0xf]
    %v151 = vld [vmem:[#allocation6 + $0xb4] sm:$0xf]
    %v152 = vld [vmem:[#allocation6 + $0xb8] sm:$0xf]
    %v153 = vld [vmem:[#allocation6 + $0xbc] sm:$0xf]
    %v154 = vld [vmem:[#allocation6 + $0xc0] sm:$0xf]
    %v155 = vld [vmem:[#allocation6 + $0xc4] sm:$0xf]
    %v156 = vld [vmem:[#allocation6 + $0xc8] sm:$0xf]
    %v157 = vld [vmem:[#allocation6 + $0xcc] sm:$0xf]
    %v158 = vld [vmem:[#allocation6 + $0xd0] sm:$0xf]
    %v159 = vld [vmem:[#allocation6 + $0xd4] sm:$0xf]
    %v160 = vld [vmem:[#allocation6 + $0xd8] sm:$0xf]
    %v161 = vld [vmem:[#allocation6 + $0xdc] sm:$0xf]
    %v162 = vld [vmem:[#allocation6 + $0xe0] sm:$0xf]
    %v163 = vld [vmem:[#allocation6 + $0xe4] sm:$0xf]
    %v164 = vld [vmem:[#allocation6 + $0xe8] sm:$0xf]
    %v165 = vld [vmem:[#allocation6 + $0xec] sm:$0xf]
    %v166 = vld [vmem:[#allocation6 + $0xf0] sm:$0xf]
    %v167 = vld [vmem:[#allocation6 + $0xf4] sm:$0xf]
    %v168 = vld [vmem:[#allocation6 + $0xf8] sm:$0xf]
    %v169 = vld [vmem:[#allocation6 + $0xfc] sm:$0xf]
    %v170 = vld [vmem:[#allocation6 + $0x100] sm:$0xf]
    %v171 = vld [vmem:[#allocation6 + $0x104] sm:$0xf]
    %v172 = vld [vmem:[#allocation6 + $0x108] sm:$0xf]
    %v173 = vld [vmem:[#allocation6 + $0x10c] sm:$0xf]
    %v174 = vld [vmem:[#allocation6 + $0x110] sm:$0xf]
    %v175 = vld [vmem:[#allocation6 + $0x114] sm:$0xf]
    %v176 = vld [vmem:[#allocation6 + $0x118] sm:$0xf]
    %v177 = vld [vmem:[#allocation6 + $0x11c] sm:$0xf]
    %v178 = vld [vmem:[#allocation6 + $0x120] sm:$0xf]
    %v179 = vld [vmem:[#allocation6 + $0x124] sm:$0xf]
    %v180 = vld [vmem:[#allocation6 + $0x128] sm:$0xf]
    %v181 = vld [vmem:[#allocation6 + $0x12c] sm:$0xf]
    %v182 = vld [vmem:[#allocation6 + $0x130] sm:$0xf]
    %v183 = vld [vmem:[#allocation6 + $0x134] sm:$0xf]
    %v184 = vld [vmem:[#allocation6 + $0x138] sm:$0xf]
    %v185 = vld [vmem:[#allocation6 + $0x13c] sm:$0xf]
    %v186 = vld [vmem:[#allocation6 + $0x140] sm:$0xf]
    %v187 = vld [vmem:[#allocation6 + $0x144] sm:$0xf]
    %v188 = vld [vmem:[#allocation6 + $0x148] sm:$0xf]
    %v189 = vld [vmem:[#allocation6 + $0x14c] sm:$0xf]
    %v190 = vld [vmem:[#allocation6 + $0x150] sm:$0xf]
    %v191 = vld [vmem:[#allocation6 + $0x154] sm:$0xf]
    %v192 = vld [vmem:[#allocation6 + $0x158] sm:$0xf]
    %v193 = vld [vmem:[#allocation6 + $0x15c] sm:$0xf]
    %v194 = vld [vmem:[#allocation6 + $0x160] sm:$0xf]
    %v195 = vld [vmem:[#allocation6 + $0x164] sm:$0xf]
    %v196 = vld [vmem:[#allocation6 + $0x168] sm:$0xf]
    %v197 = vld [vmem:[#allocation6 + $0x16c] sm:$0xf]
    %v198 = vld [vmem:[#allocation6 + $0x170] sm:$0xf]
    %v199 = vld [vmem:[#allocation6 + $0x174] sm:$0xf]
    %v200 = vld [vmem:[#allocation6 + $0x178] sm:$0xf]
    %v201 = vld [vmem:[#allocation6 + $0x17c] sm:$0xf]
    %v202 = vld [vmem:[#allocation6 + $0x180] sm:$0xf]
    %v203 = vld [vmem:[#allocation6 + $0x184] sm:$0xf]
    %v204 = vld [vmem:[#allocation6 + $0x188] sm:$0xf]
    %v205 = vld [vmem:[#allocation6 + $0x18c] sm:$0xf]
    %v206 = vld [vmem:[#allocation6 + $0x190] sm:$0xf]
    %v207 = vld [vmem:[#allocation6 + $0x194] sm:$0xf]
    %v208 = vld [vmem:[#allocation6 + $0x198] sm:$0xf]
    %v209 = vld [vmem:[#allocation6 + $0x19c] sm:$0xf]
    %v210 = vld [vmem:[#allocation6 + $0x1a0] sm:$0xf]
    %v211 = vld [vmem:[#allocation6 + $0x1a4] sm:$0xf]
    %v212 = vld [vmem:[#allocation6 + $0x1a8] sm:$0xf]
    %v213 = vld [vmem:[#allocation6 + $0x1ac] sm:$0xf]
    %v214 = vld [vmem:[#allocation6 + $0x1b0] sm:$0xf]
    %v215 = vld [vmem:[#allocation6 + $0x1b4] sm:$0xf]
    %v216 = vld [vmem:[#allocation6 + $0x1b8] sm:$0xf]
    %v217 = vld [vmem:[#allocation6 + $0x1bc] sm:$0xf]
    %v218 = vld [vmem:[#allocation6 + $0x1c0] sm:$0xf]
    %v219 = vld [vmem:[#allocation6 + $0x1c4] sm:$0xf]
    %v220 = vld [vmem:[#allocation6 + $0x1c8] sm:$0xf]
    %v221 = vld [vmem:[#allocation6 + $0x1cc] sm:$0xf]
    %v222 = vld [vmem:[#allocation6 + $0x1d0] sm:$0xf]
    %v223 = vld [vmem:[#allocation6 + $0x1d4] sm:$0xf]
    %v224 = vld [vmem:[#allocation6 + $0x1d8] sm:$0xf]
    %v225 = vld [vmem:[#allocation6 + $0x1dc] sm:$0xf]
    %v226 = vld [vmem:[#allocation6 + $0x1e0] sm:$0xf]
    %v227 = vld [vmem:[#allocation6 + $0x1e4] sm:$0xf]
    %v228 = vld [vmem:[#allocation6 + $0x1e8] sm:$0xf]
    %v229 = vld [vmem:[#allocation6 + $0x1ec] sm:$0xf]
    %v230 = vld [vmem:[#allocation6 + $0x1f0] sm:$0xf]
    %v231 = vld [vmem:[#allocation6 + $0x1f4] sm:$0xf]
    %v232 = vld [vmem:[#allocation6 + $0x1f8] sm:$0xf]
    %v233 = vld [vmem:[#allocation6 + $0x1fc] sm:$0xf]
    %v242 = vunpack.c.l.b16 %v98
    %v243 = vunpack.c.h.b16 %v98
    %v244 = vunpack.c.l.b16 %v99
    %v245 = vunpack.c.h.b16 %v99
    %v246 = vunpack.c.l.b16 %v100
    %v247 = vunpack.c.h.b16 %v100
    %v248 = vunpack.c.l.b16 %v101
    %v249 = vunpack.c.h.b16 %v101
    %v250 = vunpack.c.l.b16 %v102
    %v251 = vunpack.c.h.b16 %v102
    %v252 = vunpack.c.l.b16 %v103
    %v253 = vunpack.c.h.b16 %v103
    %v254 = vunpack.c.l.b16 %v104
    %v255 = vunpack.c.h.b16 %v104
    %v256 = vunpack.c.l.b16 %v105
    %v257 = vunpack.c.h.b16 %v105
    %v258 = vpack.c.b16 %v250, %v242
    %v259 = vpack.c.b16 %v251, %v243
    %v260 = vpack.c.b16 %v252, %v244
    %v261 = vpack.c.b16 %v253, %v245
    %v262 = vpack.c.b16 %v254, %v246
    %v263 = vpack.c.b16 %v255, %v247
    %v264 = vpack.c.b16 %v256, %v248
    %v265 = vpack.c.b16 %v257, %v249
    %v402 = vunpack.c.l.b16 %v106
    %v403 = vunpack.c.l.b16 %v107
    %v404 = vunpack.c.l.b16 %v108
    %v405 = vunpack.c.l.b16 %v109
    %v406 = vunpack.c.l.b16 %v110
    %v407 = vunpack.c.l.b16 %v111
    %v408 = vunpack.c.l.b16 %v112
    %v409 = vunpack.c.l.b16 %v113
    %v410 = vunpack.c.l.b16 %v114
    %v411 = vunpack.c.l.b16 %v115
    %v412 = vunpack.c.l.b16 %v116
    %v413 = vunpack.c.l.b16 %v117
    %v414 = vunpack.c.l.b16 %v118
    %v415 = vunpack.c.l.b16 %v119
    %v416 = vunpack.c.l.b16 %v120
    %v417 = vunpack.c.l.b16 %v121
    %v418 = vunpack.c.l.b16 %v122
    %v419 = vunpack.c.l.b16 %v123
    %v420 = vunpack.c.l.b16 %v124
    %v421 = vunpack.c.l.b16 %v125
    %v422 = vunpack.c.l.b16 %v126
    %v423 = vunpack.c.l.b16 %v127
    %v424 = vunpack.c.l.b16 %v128
    %v425 = vunpack.c.l.b16 %v129
    %v426 = vunpack.c.l.b16 %v130
    %v427 = vunpack.c.l.b16 %v131
    %v428 = vunpack.c.l.b16 %v132
    %v429 = vunpack.c.l.b16 %v133
    %v430 = vunpack.c.l.b16 %v134
    %v431 = vunpack.c.l.b16 %v135
    %v432 = vunpack.c.l.b16 %v136
    %v433 = vunpack.c.l.b16 %v137
    %v434 = vunpack.c.l.b16 %v138
    %v435 = vunpack.c.l.b16 %v139
    %v436 = vunpack.c.l.b16 %v140
    %v437 = vunpack.c.l.b16 %v141
    %v438 = vunpack.c.l.b16 %v142
    %v439 = vunpack.c.l.b16 %v143
    %v440 = vunpack.c.l.b16 %v144
    %v441 = vunpack.c.l.b16 %v145
    %v442 = vunpack.c.l.b16 %v146
    %v443 = vunpack.c.l.b16 %v147
    %v444 = vunpack.c.l.b16 %v148
    %v445 = vunpack.c.l.b16 %v149
    %v446 = vunpack.c.l.b16 %v150
    %v447 = vunpack.c.l.b16 %v151
    %v448 = vunpack.c.l.b16 %v152
    %v449 = vunpack.c.l.b16 %v153
    %v450 = vunpack.c.l.b16 %v154
    %v451 = vunpack.c.l.b16 %v155
    %v452 = vunpack.c.l.b16 %v156
    %v453 = vunpack.c.l.b16 %v157
    %v454 = vunpack.c.l.b16 %v158
    %v455 = vunpack.c.l.b16 %v159
    %v456 = vunpack.c.l.b16 %v160
    %v457 = vunpack.c.l.b16 %v161
    %v458 = vunpack.c.l.b16 %v162
    %v459 = vunpack.c.l.b16 %v163
    %v460 = vunpack.c.l.b16 %v164
    %v461 = vunpack.c.l.b16 %v165
    %v462 = vunpack.c.l.b16 %v166
    %v463 = vunpack.c.l.b16 %v167
    %v464 = vunpack.c.l.b16 %v168
    %v465 = vunpack.c.l.b16 %v169
    %v466 = vunpack.c.l.b16 %v170
    %v467 = vunpack.c.l.b16 %v171
    %v468 = vunpack.c.l.b16 %v172
    %v469 = vunpack.c.l.b16 %v173
    %v470 = vunpack.c.l.b16 %v174
    %v471 = vunpack.c.l.b16 %v175
    %v472 = vunpack.c.l.b16 %v176
    %v473 = vunpack.c.l.b16 %v177
    %v474 = vunpack.c.l.b16 %v178
    %v475 = vunpack.c.l.b16 %v179
    %v476 = vunpack.c.l.b16 %v180
    %v477 = vunpack.c.l.b16 %v181
    %v478 = vunpack.c.l.b16 %v182
    %v479 = vunpack.c.l.b16 %v183
    %v480 = vunpack.c.l.b16 %v184
    %v481 = vunpack.c.l.b16 %v185
    %v482 = vunpack.c.l.b16 %v186
    %v483 = vunpack.c.l.b16 %v187
    %v484 = vunpack.c.l.b16 %v188
    %v485 = vunpack.c.l.b16 %v189
    %v486 = vunpack.c.l.b16 %v190
    %v487 = vunpack.c.l.b16 %v191
    %v488 = vunpack.c.l.b16 %v192
    %v489 = vunpack.c.l.b16 %v193
    %v490 = vunpack.c.l.b16 %v194
    %v491 = vunpack.c.l.b16 %v195
    %v492 = vunpack.c.l.b16 %v196
    %v493 = vunpack.c.l.b16 %v197
    %v494 = vunpack.c.l.b16 %v198
    %v495 = vunpack.c.l.b16 %v199
    %v496 = vunpack.c.l.b16 %v200
    %v497 = vunpack.c.l.b16 %v201
    %v498 = vunpack.c.l.b16 %v202
    %v499 = vunpack.c.l.b16 %v203
    %v500 = vunpack.c.l.b16 %v204
    %v501 = vunpack.c.l.b16 %v205
    %v502 = vunpack.c.l.b16 %v206
    %v503 = vunpack.c.l.b16 %v207
    %v504 = vunpack.c.l.b16 %v208
    %v505 = vunpack.c.l.b16 %v209
    %v506 = vunpack.c.l.b16 %v210
    %v507 = vunpack.c.l.b16 %v211
    %v508 = vunpack.c.l.b16 %v212
    %v509 = vunpack.c.l.b16 %v213
    %v510 = vunpack.c.l.b16 %v214
    %v511 = vunpack.c.l.b16 %v215
    %v512 = vunpack.c.l.b16 %v216
    %v513 = vunpack.c.l.b16 %v217
    %v514 = vunpack.c.l.b16 %v218
    %v515 = vunpack.c.l.b16 %v219
    %v516 = vunpack.c.l.b16 %v220
    %v517 = vunpack.c.l.b16 %v221
    %v518 = vunpack.c.l.b16 %v222
    %v519 = vunpack.c.l.b16 %v223
    %v520 = vunpack.c.l.b16 %v224
    %v521 = vunpack.c.l.b16 %v225
    %v522 = vunpack.c.l.b16 %v226
    %v523 = vunpack.c.l.b16 %v227
    %v524 = vunpack.c.l.b16 %v228
    %v525 = vunpack.c.l.b16 %v229
    %v526 = vunpack.c.l.b16 %v230
    %v527 = vunpack.c.l.b16 %v231
    %v528 = vunpack.c.l.b16 %v232
    %v529 = vunpack.c.l.b16 %v233
    %v530 = vpack.c.b16 %v403, %v402
    %v531 = vpack.c.b16 %v405, %v404
    %v532 = vpack.c.b16 %v407, %v406
    %v533 = vpack.c.b16 %v409, %v408
    %v534 = vpack.c.b16 %v411, %v410
    %v535 = vpack.c.b16 %v413, %v412
    %v536 = vpack.c.b16 %v415, %v414
    %v537 = vpack.c.b16 %v417, %v416
    %v538 = vpack.c.b16 %v419, %v418
    %v539 = vpack.c.b16 %v421, %v420
    %v540 = vpack.c.b16 %v423, %v422
    %v541 = vpack.c.b16 %v425, %v424
    %v542 = vpack.c.b16 %v427, %v426
    %v543 = vpack.c.b16 %v429, %v428
    %v544 = vpack.c.b16 %v431, %v430
    %v545 = vpack.c.b16 %v433, %v432
    %v546 = vpack.c.b16 %v435, %v434
    %v547 = vpack.c.b16 %v437, %v436
    %v548 = vpack.c.b16 %v439, %v438
    %v549 = vpack.c.b16 %v441, %v440
    %v550 = vpack.c.b16 %v443, %v442
    %v551 = vpack.c.b16 %v445, %v444
    %v552 = vpack.c.b16 %v447, %v446
    %v553 = vpack.c.b16 %v449, %v448
    %v554 = vpack.c.b16 %v451, %v450
    %v555 = vpack.c.b16 %v453, %v452
    %v556 = vpack.c.b16 %v455, %v454
    %v557 = vpack.c.b16 %v457, %v456
    %v558 = vpack.c.b16 %v459, %v458
    %v559 = vpack.c.b16 %v461, %v460
    %v560 = vpack.c.b16 %v463, %v462
    %v561 = vpack.c.b16 %v465, %v464
    %v562 = vpack.c.b16 %v467, %v466
    %v563 = vpack.c.b16 %v469, %v468
    %v564 = vpack.c.b16 %v471, %v470
    %v565 = vpack.c.b16 %v473, %v472
    %v566 = vpack.c.b16 %v475, %v474
    %v567 = vpack.c.b16 %v477, %v476
    %v568 = vpack.c.b16 %v479, %v478
    %v569 = vpack.c.b16 %v481, %v480
    %v570 = vpack.c.b16 %v483, %v482
    %v571 = vpack.c.b16 %v485, %v484
    %v572 = vpack.c.b16 %v487, %v486
    %v573 = vpack.c.b16 %v489, %v488
    %v574 = vpack.c.b16 %v491, %v490
    %v575 = vpack.c.b16 %v493, %v492
    %v576 = vpack.c.b16 %v495, %v494
    %v577 = vpack.c.b16 %v497, %v496
    %v578 = vpack.c.b16 %v499, %v498
    %v579 = vpack.c.b16 %v501, %v500
    %v580 = vpack.c.b16 %v503, %v502
    %v581 = vpack.c.b16 %v505, %v504
    %v582 = vpack.c.b16 %v507, %v506
    %v583 = vpack.c.b16 %v509, %v508
    %v584 = vpack.c.b16 %v511, %v510
    %v585 = vpack.c.b16 %v513, %v512
    %v586 = vpack.c.b16 %v515, %v514
    %v587 = vpack.c.b16 %v517, %v516
    %v588 = vpack.c.b16 %v519, %v518
    %v589 = vpack.c.b16 %v521, %v520
    %v590 = vpack.c.b16 %v523, %v522
    %v591 = vpack.c.b16 %v525, %v524
    %v592 = vpack.c.b16 %v527, %v526
    %v593 = vpack.c.b16 %v529, %v528
    %658 = vmatprep.subr.bf16.mxu0 0
    %659 = vmatpush1.bf16.msra.mxu0 %v530
    %660 = vmatprep.subr.bf16.mxu0 0
    %661 = vmatpush1.bf16.msra.mxu0 %v531
    %662 = vmatprep.subr.bf16.mxu0 0
    %663 = vmatpush1.bf16.msra.mxu0 %v532
    %664 = vmatprep.subr.bf16.mxu0 0
    %665 = vmatpush1.bf16.msra.mxu0 %v533
    %666 = vmatprep.subr.bf16.mxu0 0
    %667 = vmatpush1.bf16.msra.mxu0 %v534
    %668 = vmatprep.subr.bf16.mxu0 0
    %669 = vmatpush1.bf16.msra.mxu0 %v535
    %670 = vmatprep.subr.bf16.mxu0 0
    %671 = vmatpush1.bf16.msra.mxu0 %v536
    %672 = vmatprep.subr.bf16.mxu0 0
    %673 = vmatpush1.bf16.msra.mxu0 %v537
    %674 = vmatprep.subr.bf16.mxu0 0
    %675 = vmatpush1.bf16.msra.mxu0 %v538
    %676 = vmatprep.subr.bf16.mxu0 0
    %677 = vmatpush1.bf16.msra.mxu0 %v539
    %678 = vmatprep.subr.bf16.mxu0 0
    %679 = vmatpush1.bf16.msra.mxu0 %v540
    %680 = vmatprep.subr.bf16.mxu0 0
    %681 = vmatpush1.bf16.msra.mxu0 %v541
    %682 = vmatprep.subr.bf16.mxu0 0
    %683 = vmatpush1.bf16.msra.mxu0 %v542
    %684 = vmatprep.subr.bf16.mxu0 0
    %685 = vmatpush1.bf16.msra.mxu0 %v543
    %686 = vmatprep.subr.bf16.mxu0 0
    %687 = vmatpush1.bf16.msra.mxu0 %v544
    %688 = vmatprep.subr.bf16.mxu0 0
    %689 = vmatpush1.bf16.msra.mxu0 %v545
    %690 = vmatprep.mubr.bf16.mxu0 %v259
    %691 = vmatmul.mubr.bf16.gmra.mrb[0].mxu0 %v258
    %v692 = vpop.f32.mrb[0].mxu0
    %v693 = vadd.f32 0.0, %v692
    %v694 = vpop.f32.mrb[0].mxu0
    %v695 = vpop.f32.mrb[0].mxu0
    %v696 = vadd.f32 0.0, %v695
    %v697 = vpop.f32.mrb[0].mxu0
    %698 = vdwg.mxu0
    %699 = vmatprep.subr.bf16.mxu0 0
    %700 = vmatpush1.bf16.msra.mxu0 %v546
    %701 = vmatprep.subr.bf16.mxu0 0
    %702 = vmatpush1.bf16.msra.mxu0 %v547
    %703 = vmatprep.subr.bf16.mxu0 0
    %704 = vmatpush1.bf16.msra.mxu0 %v548
    %705 = vmatprep.subr.bf16.mxu0 0
    %706 = vmatpush1.bf16.msra.mxu0 %v549
    %707 = vmatprep.subr.bf16.mxu0 0
    %708 = vmatpush1.bf16.msra.mxu0 %v550
    %709 = vmatprep.subr.bf16.mxu0 0
    %710 = vmatpush1.bf16.msra.mxu0 %v551
    %711 = vmatprep.subr.bf16.mxu0 0
    %712 = vmatpush1.bf16.msra.mxu0 %v552
    %713 = vmatprep.subr.bf16.mxu0 0
    %714 = vmatpush1.bf16.msra.mxu0 %v553
    %715 = vmatprep.subr.bf16.mxu0 0
    %716 = vmatpush1.bf16.msra.mxu0 %v554
    %717 = vmatprep.subr.bf16.mxu0 0
    %718 = vmatpush1.bf16.msra.mxu0 %v555
    %719 = vmatprep.subr.bf16.mxu0 0
    %720 = vmatpush1.bf16.msra.mxu0 %v556
    %721 = vmatprep.subr.bf16.mxu0 0
    %722 = vmatpush1.bf16.msra.mxu0 %v557
    %723 = vmatprep.subr.bf16.mxu0 0
    %724 = vmatpush1.bf16.msra.mxu0 %v558
    %725 = vmatprep.subr.bf16.mxu0 0
    %726 = vmatpush1.bf16.msra.mxu0 %v559
    %727 = vmatprep.subr.bf16.mxu0 0
    %728 = vmatpush1.bf16.msra.mxu0 %v560
    %729 = vmatprep.subr.bf16.mxu0 0
    %730 = vmatpush1.bf16.msra.mxu0 %v561
    %731 = vmatprep.mubr.bf16.mxu0 %v261
    %732 = vmatmul.mubr.bf16.gmra.mrb[0].mxu0 %v260
    %v733 = vpop.f32.mrb[0].mxu0
    %v734 = vadd.f32 %v693, %v733
    %v735 = vpop.f32.mrb[0].mxu0
    %v736 = vpop.f32.mrb[0].mxu0
    %v737 = vadd.f32 %v696, %v736
    %v738 = vpop.f32.mrb[0].mxu0
    %739 = vdwg.mxu0
    %740 = vmatprep.subr.bf16.mxu0 0
    %741 = vmatpush1.bf16.msra.mxu0 %v562
    %742 = vmatprep.subr.bf16.mxu0 0
    %743 = vmatpush1.bf16.msra.mxu0 %v563
    %744 = vmatprep.subr.bf16.mxu0 0
    %745 = vmatpush1.bf16.msra.mxu0 %v564
    %746 = vmatprep.subr.bf16.mxu0 0
    %747 = vmatpush1.bf16.msra.mxu0 %v565
    %748 = vmatprep.subr.bf16.mxu0 0
    %749 = vmatpush1.bf16.msra.mxu0 %v566
    %750 = vmatprep.subr.bf16.mxu0 0
    %751 = vmatpush1.bf16.msra.mxu0 %v567
    %752 = vmatprep.subr.bf16.mxu0 0
    %753 = vmatpush1.bf16.msra.mxu0 %v568
    %754 = vmatprep.subr.bf16.mxu0 0
    %755 = vmatpush1.bf16.msra.mxu0 %v569
    %756 = vmatprep.subr.bf16.mxu0 0
    %757 = vmatpush1.bf16.msra.mxu0 %v570
    %758 = vmatprep.subr.bf16.mxu0 0
    %759 = vmatpush1.bf16.msra.mxu0 %v571
    %760 = vmatprep.subr.bf16.mxu0 0
    %761 = vmatpush1.bf16.msra.mxu0 %v572
    %762 = vmatprep.subr.bf16.mxu0 0
    %763 = vmatpush1.bf16.msra.mxu0 %v573
    %764 = vmatprep.subr.bf16.mxu0 0
    %765 = vmatpush1.bf16.msra.mxu0 %v574
    %766 = vmatprep.subr.bf16.mxu0 0
    %767 = vmatpush1.bf16.msra.mxu0 %v575
    %768 = vmatprep.subr.bf16.mxu0 0
    %769 = vmatpush1.bf16.msra.mxu0 %v576
    %770 = vmatprep.subr.bf16.mxu0 0
    %771 = vmatpush1.bf16.msra.mxu0 %v577
    %772 = vmatprep.mubr.bf16.mxu0 %v263
    %773 = vmatmul.mubr.bf16.gmra.mrb[0].mxu0 %v262
    %v774 = vpop.f32.mrb[0].mxu0
    %v775 = vadd.f32 %v734, %v774
    %v776 = vpop.f32.mrb[0].mxu0
    %v777 = vpop.f32.mrb[0].mxu0
    %v778 = vadd.f32 %v737, %v777
    %v779 = vpop.f32.mrb[0].mxu0
    %780 = vdwg.mxu0
    %781 = vmatprep.subr.bf16.mxu0 0
    %782 = vmatpush1.bf16.msra.mxu0 %v578
    %783 = vmatprep.subr.bf16.mxu0 0
    %784 = vmatpush1.bf16.msra.mxu0 %v579
    %785 = vmatprep.subr.bf16.mxu0 0
    %786 = vmatpush1.bf16.msra.mxu0 %v580
    %787 = vmatprep.subr.bf16.mxu0 0
    %788 = vmatpush1.bf16.msra.mxu0 %v581
    %789 = vmatprep.subr.bf16.mxu0 0
    %790 = vmatpush1.bf16.msra.mxu0 %v582
    %791 = vmatprep.subr.bf16.mxu0 0
    %792 = vmatpush1.bf16.msra.mxu0 %v583
    %793 = vmatprep.subr.bf16.mxu0 0
    %794 = vmatpush1.bf16.msra.mxu0 %v584
    %795 = vmatprep.subr.bf16.mxu0 0
    %796 = vmatpush1.bf16.msra.mxu0 %v585
    %797 = vmatprep.subr.bf16.mxu0 0
    %798 = vmatpush1.bf16.msra.mxu0 %v586
    %799 = vmatprep.subr.bf16.mxu0 0
    %800 = vmatpush1.bf16.msra.mxu0 %v587
    %801 = vmatprep.subr.bf16.mxu0 0
    %802 = vmatpush1.bf16.msra.mxu0 %v588
    %803 = vmatprep.subr.bf16.mxu0 0
    %804 = vmatpush1.bf16.msra.mxu0 %v589
    %805 = vmatprep.subr.bf16.mxu0 0
    %806 = vmatpush1.bf16.msra.mxu0 %v590
    %807 = vmatprep.subr.bf16.mxu0 0
    %808 = vmatpush1.bf16.msra.mxu0 %v591
    %809 = vmatprep.subr.bf16.mxu0 0
    %810 = vmatpush1.bf16.msra.mxu0 %v592
    %811 = vmatprep.subr.bf16.mxu0 0
    %812 = vmatpush1.bf16.msra.mxu0 %v593
    %813 = vmatprep.mubr.bf16.mxu0 %v265
    %814 = vmatmul.mubr.bf16.gmra.mrb[0].mxu0 %v264
    %v815 = vpop.f32.mrb[0].mxu0
    %v816 = vadd.f32 %v775, %v815
    %v817 = vpop.f32.mrb[0].mxu0
    %v818 = vpop.f32.mrb[0].mxu0
    %v819 = vadd.f32 %v778, %v818
    %v820 = vpop.f32.mrb[0].mxu0
    %821 = vdwg.mxu0
    %v822 = vadd.f32 %v96, %v816
    %v823 = vadd.f32 %v97, %v819
    %824 = vst [vmem:[#allocation2] sm:$0xff] %v822
    %825 = vst [vmem:[#allocation2 + $0x8] sm:$0xff] %v823
    // Predicated region
    $region50: #{tpu_custom_call.1} parent=1 // pred_check
      %p826 = pneg %p83
    $region51: #{tpu_custom_call.1} parent=1 // pred_check_branch
      %828 = sbr.rel (%p826) target = $region53
    $region52: #{tpu_custom_call.1} parent=1 // pred_region
      %v829 = vld [vmem:[#allocation2] sm:$0xff]
      %v830 = vld [vmem:[#allocation2 + $0x8] sm:$0xff]
      %v831 = vpack.c.bf16 %v830, %v829
      %v832 = vld [vmem:[#allocation8] sm:$0xff]
      %v833 = vld [vmem:[#allocation8 + $0x8] sm:$0xff]
      %v834 = vld [vmem:[#allocation8 + $0x10] sm:$0xff]
      %v835 = vld [vmem:[#allocation8 + $0x18] sm:$0xff]
      %v836 = vld [vmem:[#allocation8 + $0x20] sm:$0xff]
      %v837 = vld [vmem:[#allocation8 + $0x28] sm:$0xff]
      %v838 = vld [vmem:[#allocation8 + $0x30] sm:$0xff]
      %v839 = vld [vmem:[#allocation8 + $0x38] sm:$0xff]
      %v840 = vld [vmem:[#allocation8 + $0x40] sm:$0xff]
      %v841 = vld [vmem:[#allocation8 + $0x48] sm:$0xff]
      %v842 = vld [vmem:[#allocation8 + $0x50] sm:$0xff]
      %v843 = vld [vmem:[#allocation8 + $0x58] sm:$0xff]
      %v844 = vld [vmem:[#allocation8 + $0x60] sm:$0xff]
      %v845 = vld [vmem:[#allocation8 + $0x68] sm:$0xff]
      %v846 = vld [vmem:[#allocation8 + $0x70] sm:$0xff]
      %v847 = vld [vmem:[#allocation8 + $0x78] sm:$0xff]
      %v848 = vld [vmem:[#allocation8 + $0x80] sm:$0xff]
      %v849 = vld [vmem:[#allocation8 + $0x88] sm:$0xff]
      %v850 = vld [vmem:[#allocation8 + $0x90] sm:$0xff]
      %v851 = vld [vmem:[#allocation8 + $0x98] sm:$0xff]
      %v852 = vld [vmem:[#allocation8 + $0xa0] sm:$0xff]
      %v853 = vld [vmem:[#allocation8 + $0xa8] sm:$0xff]
      %v854 = vld [vmem:[#allocation8 + $0xb0] sm:$0xff]
      %v855 = vld [vmem:[#allocation8 + $0xb8] sm:$0xff]
      %v856 = vld [vmem:[#allocation8 + $0xc0] sm:$0xff]
      %v857 = vld [vmem:[#allocation8 + $0xc8] sm:$0xff]
      %v858 = vld [vmem:[#allocation8 + $0xd0] sm:$0xff]
      %v859 = vld [vmem:[#allocation8 + $0xd8] sm:$0xff]
      %v860 = vld [vmem:[#allocation8 + $0xe0] sm:$0xff]
      %v861 = vld [vmem:[#allocation8 + $0xe8] sm:$0xff]
      %v862 = vld [vmem:[#allocation8 + $0xf0] sm:$0xff]
      %v863 = vld [vmem:[#allocation8 + $0xf8] sm:$0xff]
      %v864 = vld [vmem:[%s4] sm:$0xf]
      %v866 = vlaneseq
      %v867 = vshrl.u32 %v866, 7
      %v868 = vsub.s32 0, %v867
      %v869 = vrot.slane %v864, %v868
      %v870 = vlaneseq
      %v871 = vshrl.u32 %v870, 7
      %v872 = vsub.s32 1, %v871
      %v873 = vrot.slane %v864, %v872
      %v874 = vlaneseq
      %v875 = vshrl.u32 %v874, 7
      %v876 = vsub.s32 2, %v875
      %v877 = vrot.slane %v864, %v876
      %v878 = vlaneseq
      %v879 = vshrl.u32 %v878, 7
      %v880 = vsub.s32 3, %v879
      %v881 = vrot.slane %v864, %v880
      %v918 = vunpack.c.l.b16 %v832
      %v919 = vunpack.c.h.b16 %v832
      %v920 = vunpack.c.l.b16 %v833
      %v921 = vunpack.c.h.b16 %v833
      %v922 = vunpack.c.l.b16 %v834
      %v923 = vunpack.c.h.b16 %v834
      %v924 = vunpack.c.l.b16 %v835
      %v925 = vunpack.c.h.b16 %v835
      %v926 = vunpack.c.l.b16 %v836
      %v927 = vunpack.c.h.b16 %v836
      %v928 = vunpack.c.l.b16 %v837
      %v929 = vunpack.c.h.b16 %v837
      %v930 = vunpack.c.l.b16 %v838
      %v931 = vunpack.c.h.b16 %v838
      %v932 = vunpack.c.l.b16 %v839
      %v933 = vunpack.c.h.b16 %v839
      %v934 = vunpack.c.l.b16 %v840
      %v935 = vunpack.c.h.b16 %v840
      %v936 = vunpack.c.l.b16 %v841
      %v937 = vunpack.c.h.b16 %v841
      %v938 = vunpack.c.l.b16 %v842
      %v939 = vunpack.c.h.b16 %v842
      %v940 = vunpack.c.l.b16 %v843
      %v941 = vunpack.c.h.b16 %v843
      %v942 = vunpack.c.l.b16 %v844
      %v943 = vunpack.c.h.b16 %v844
      %v944 = vunpack.c.l.b16 %v845
      %v945 = vunpack.c.h.b16 %v845
      %v946 = vunpack.c.l.b16 %v846
      %v947 = vunpack.c.h.b16 %v846
      %v948 = vunpack.c.l.b16 %v847
      %v949 = vunpack.c.h.b16 %v847
      %v950 = vunpack.c.l.b16 %v848
      %v951 = vunpack.c.h.b16 %v848
      %v952 = vunpack.c.l.b16 %v849
      %v953 = vunpack.c.h.b16 %v849
      %v954 = vunpack.c.l.b16 %v850
      %v955 = vunpack.c.h.b16 %v850
      %v956 = vunpack.c.l.b16 %v851
      %v957 = vunpack.c.h.b16 %v851
      %v958 = vunpack.c.l.b16 %v852
      %v959 = vunpack.c.h.b16 %v852
      %v960 = vunpack.c.l.b16 %v853
      %v961 = vunpack.c.h.b16 %v853
      %v962 = vunpack.c.l.b16 %v854
      %v963 = vunpack.c.h.b16 %v854
      %v964 = vunpack.c.l.b16 %v855
      %v965 = vunpack.c.h.b16 %v855
      %v966 = vunpack.c.l.b16 %v856
      %v967 = vunpack.c.h.b16 %v856
      %v968 = vunpack.c.l.b16 %v857
      %v969 = vunpack.c.h.b16 %v857
      %v970 = vunpack.c.l.b16 %v858
      %v971 = vunpack.c.h.b16 %v858
      %v972 = vunpack.c.l.b16 %v859
      %v973 = vunpack.c.h.b16 %v859
      %v974 = vunpack.c.l.b16 %v860
      %v975 = vunpack.c.h.b16 %v860
      %v976 = vunpack.c.l.b16 %v861
      %v977 = vunpack.c.h.b16 %v861
      %v978 = vunpack.c.l.b16 %v862
      %v979 = vunpack.c.h.b16 %v862
      %v980 = vunpack.c.l.b16 %v863
      %v981 = vunpack.c.h.b16 %v863
      %v982 = vpack.c.b16 %v922, %v918
      %v983 = vpack.c.b16 %v923, %v919
      %v984 = vpack.c.b16 %v924, %v920
      %v985 = vpack.c.b16 %v925, %v921
      %v986 = vpack.c.b16 %v930, %v926
      %v987 = vpack.c.b16 %v931, %v927
      %v988 = vpack.c.b16 %v932, %v928
      %v989 = vpack.c.b16 %v933, %v929
      %v990 = vpack.c.b16 %v938, %v934
      %v991 = vpack.c.b16 %v939, %v935
      %v992 = vpack.c.b16 %v940, %v936
      %v993 = vpack.c.b16 %v941, %v937
      %v994 = vpack.c.b16 %v946, %v942
      %v995 = vpack.c.b16 %v947, %v943
      %v996 = vpack.c.b16 %v948, %v944
      %v997 = vpack.c.b16 %v949, %v945
      %v998 = vpack.c.b16 %v954, %v950
      %v999 = vpack.c.b16 %v955, %v951
      %v1000 = vpack.c.b16 %v956, %v952
      %v1001 = vpack.c.b16 %v957, %v953
      %v1002 = vpack.c.b16 %v962, %v958
      %v1003 = vpack.c.b16 %v963, %v959
      %v1004 = vpack.c.b16 %v964, %v960
      %v1005 = vpack.c.b16 %v965, %v961
      %v1006 = vpack.c.b16 %v970, %v966
      %v1007 = vpack.c.b16 %v971, %v967
      %v1008 = vpack.c.b16 %v972, %v968
      %v1009 = vpack.c.b16 %v973, %v969
      %v1010 = vpack.c.b16 %v978, %v974
      %v1011 = vpack.c.b16 %v979, %v975
      %v1012 = vpack.c.b16 %v980, %v976
      %v1013 = vpack.c.b16 %v981, %v977
      %1046 = vmatprep.subr.bf16.mxu0 %v983
      %1047 = vmatpush1.bf16.msra.mxu0 %v982
      %1048 = vmatprep.subr.bf16.mxu0 %v987
      %1049 = vmatpush1.bf16.msra.mxu0 %v986
      %1050 = vmatprep.subr.bf16.mxu0 %v991
      %1051 = vmatpush1.bf16.msra.mxu0 %v990
      %1052 = vmatprep.subr.bf16.mxu0 %v995
      %1053 = vmatpush1.bf16.msra.mxu0 %v994
      %1054 = vmatprep.subr.bf16.mxu0 %v999
      %1055 = vmatpush1.bf16.msra.mxu0 %v998
      %1056 = vmatprep.subr.bf16.mxu0 %v1003
      %1057 = vmatpush1.bf16.msra.mxu0 %v1002
      %1058 = vmatprep.subr.bf16.mxu0 %v1007
      %1059 = vmatpush1.bf16.msra.mxu0 %v1006
      %1060 = vmatprep.subr.bf16.mxu0 %v1011
      %1061 = vmatpush1.bf16.msra.mxu0 %v1010
      %1062 = vmatprep.subr.bf16.mxu0 0
      %1063 = vmatpush1.bf16.msra.mxu0 0
      %1064 = vmatprep.subr.bf16.mxu0 0
      %1065 = vmatpush1.bf16.msra.mxu0 0
      %1066 = vmatprep.subr.bf16.mxu0 0
      %1067 = vmatpush1.bf16.msra.mxu0 0
      %1068 = vmatprep.subr.bf16.mxu0 0
      %1069 = vmatpush1.bf16.msra.mxu0 0
      %1070 = vmatprep.subr.bf16.mxu0 0
      %1071 = vmatpush1.bf16.msra.mxu0 0
      %1072 = vmatprep.subr.bf16.mxu0 0
      %1073 = vmatpush1.bf16.msra.mxu0 0
      %1074 = vmatprep.subr.bf16.mxu0 0
      %1075 = vmatpush1.bf16.msra.mxu0 0
      %1076 = vmatprep.subr.bf16.mxu0 0
      %1077 = vmatpush1.bf16.msra.mxu0 0
      %1078 = vmatprep.mubr.bf16.mxu0 0
      %1079 = vmatmul.mubr.bf16.gmra.mrb[0].mxu0 %v831
      %v1080 = vpop.f32.mrb[0].mxu0
      %v1081 = vadd.f32 %v869, %v1080
      %v1082 = vpop.f32.mrb[0].mxu0
      %v1083 = vadd.f32 %v873, %v1082
      %v1084 = vpop.f32.mrb[0].mxu0
      %v1085 = vadd.f32 %v869, %v1084
      %v1086 = vpop.f32.mrb[0].mxu0
      %v1087 = vadd.f32 %v873, %v1086
      %1088 = vdwg.mxu0
      %1089 = vmatprep.subr.bf16.mxu0 %v985
      %1090 = vmatpush1.bf16.msra.mxu0 %v984
      %1091 = vmatprep.subr.bf16.mxu0 %v989
      %1092 = vmatpush1.bf16.msra.mxu0 %v988
      %1093 = vmatprep.subr.bf16.mxu0 %v993
      %1094 = vmatpush1.bf16.msra.mxu0 %v992
      %1095 = vmatprep.subr.bf16.mxu0 %v997
      %1096 = vmatpush1.bf16.msra.mxu0 %v996
      %1097 = vmatprep.subr.bf16.mxu0 %v1001
      %1098 = vmatpush1.bf16.msra.mxu0 %v1000
      %1099 = vmatprep.subr.bf16.mxu0 %v1005
      %1100 = vmatpush1.bf16.msra.mxu0 %v1004
      %1101 = vmatprep.subr.bf16.mxu0 %v1009
      %1102 = vmatpush1.bf16.msra.mxu0 %v1008
      %1103 = vmatprep.subr.bf16.mxu0 %v1013
      %1104 = vmatpush1.bf16.msra.mxu0 %v1012
      %1105 = vmatprep.subr.bf16.mxu0 0
      %1106 = vmatpush1.bf16.msra.mxu0 0
      %1107 = vmatprep.subr.bf16.mxu0 0
      %1108 = vmatpush1.bf16.msra.mxu0 0
      %1109 = vmatprep.subr.bf16.mxu0 0
      %1110 = vmatpush1.bf16.msra.mxu0 0
      %1111 = vmatprep.subr.bf16.mxu0 0
      %1112 = vmatpush1.bf16.msra.mxu0 0
      %1113 = vmatprep.subr.bf16.mxu0 0
      %1114 = vmatpush1.bf16.msra.mxu0 0
      %1115 = vmatprep.subr.bf16.mxu0 0
      %1116 = vmatpush1.bf16.msra.mxu0 0
      %1117 = vmatprep.subr.bf16.mxu0 0
      %1118 = vmatpush1.bf16.msra.mxu0 0
      %1119 = vmatprep.subr.bf16.mxu0 0
      %1120 = vmatpush1.bf16.msra.mxu0 0
      %1121 = vmatprep.mubr.bf16.mxu0 0
      %1122 = vmatmul.mubr.bf16.gmra.mrb[0].mxu0 %v831
      %v1123 = vpop.f32.mrb[0].mxu0
      %v1124 = vadd.f32 %v877, %v1123
      %v1125 = vpop.f32.mrb[0].mxu0
      %v1126 = vadd.f32 %v881, %v1125
      %v1127 = vpop.f32.mrb[0].mxu0
      %v1128 = vadd.f32 %v877, %v1127
      %v1129 = vpop.f32.mrb[0].mxu0
      %v1130 = vadd.f32 %v881, %v1129
      %1131 = vdwg.mxu0
      %v1132 = vmax.f32 %v1081, 0.0
      %v1133 = vmax.f32 %v1083, 0.0
      %v1134 = vmax.f32 %v1124, 0.0
      %v1135 = vmax.f32 %v1126, 0.0
      %v1136 = vmax.f32 %v1085, 0.0
      %v1137 = vmax.f32 %v1087, 0.0
      %v1138 = vmax.f32 %v1128, 0.0
      %v1139 = vmax.f32 %v1130, 0.0
      %v1140 = vpack.c.bf16 %v1136, %v1132
      %v1141 = vpack.c.bf16 %v1137, %v1133
      %v1142 = vpack.c.bf16 %v1138, %v1134
      %v1143 = vpack.c.bf16 %v1139, %v1135
      %v1144 = vld [vmem:[#allocation9] sm:$0xf]
      %v1145 = vld [vmem:[#allocation9 + $0x4] sm:$0xf]
      %v1146 = vld [vmem:[#allocation9 + $0x8] sm:$0xf]
      %v1147 = vld [vmem:[#allocation9 + $0xc] sm:$0xf]
      %v1148 = vld [vmem:[#allocation9 + $0x10] sm:$0xf]
      %v1149 = vld [vmem:[#allocation9 + $0x14] sm:$0xf]
      %v1150 = vld [vmem:[#allocation9 + $0x18] sm:$0xf]
      %v1151 = vld [vmem:[#allocation9 + $0x1c] sm:$0xf]
      %v1152 = vld [vmem:[#allocation9 + $0x20] sm:$0xf]
      %v1153 = vld [vmem:[#allocation9 + $0x24] sm:$0xf]
      %v1154 = vld [vmem:[#allocation9 + $0x28] sm:$0xf]
      %v1155 = vld [vmem:[#allocation9 + $0x2c] sm:$0xf]
      %v1156 = vld [vmem:[#allocation9 + $0x30] sm:$0xf]
      %v1157 = vld [vmem:[#allocation9 + $0x34] sm:$0xf]
      %v1158 = vld [vmem:[#allocation9 + $0x38] sm:$0xf]
      %v1159 = vld [vmem:[#allocation9 + $0x3c] sm:$0xf]
      %v1160 = vld [vmem:[#allocation9 + $0x40] sm:$0xf]
      %v1161 = vld [vmem:[#allocation9 + $0x44] sm:$0xf]
      %v1162 = vld [vmem:[#allocation9 + $0x48] sm:$0xf]
      %v1163 = vld [vmem:[#allocation9 + $0x4c] sm:$0xf]
      %v1164 = vld [vmem:[#allocation9 + $0x50] sm:$0xf]
      %v1165 = vld [vmem:[#allocation9 + $0x54] sm:$0xf]
      %v1166 = vld [vmem:[#allocation9 + $0x58] sm:$0xf]
      %v1167 = vld [vmem:[#allocation9 + $0x5c] sm:$0xf]
      %v1168 = vld [vmem:[#allocation9 + $0x60] sm:$0xf]
      %v1169 = vld [vmem:[#allocation9 + $0x64] sm:$0xf]
      %v1170 = vld [vmem:[#allocation9 + $0x68] sm:$0xf]
      %v1171 = vld [vmem:[#allocation9 + $0x6c] sm:$0xf]
      %v1172 = vld [vmem:[#allocation9 + $0x70] sm:$0xf]
      %v1173 = vld [vmem:[#allocation9 + $0x74] sm:$0xf]
      %v1174 = vld [vmem:[#allocation9 + $0x78] sm:$0xf]
      %v1175 = vld [vmem:[#allocation9 + $0x7c] sm:$0xf]
      %v1176 = vld [vmem:[#allocation9 + $0x80] sm:$0xf]
      %v1177 = vld [vmem:[#allocation9 + $0x84] sm:$0xf]
      %v1178 = vld [vmem:[#allocation9 + $0x88] sm:$0xf]
      %v1179 = vld [vmem:[#allocation9 + $0x8c] sm:$0xf]
      %v1180 = vld [vmem:[#allocation9 + $0x90] sm:$0xf]
      %v1181 = vld [vmem:[#allocation9 + $0x94] sm:$0xf]
      %v1182 = vld [vmem:[#allocation9 + $0x98] sm:$0xf]
      %v1183 = vld [vmem:[#allocation9 + $0x9c] sm:$0xf]
      %v1184 = vld [vmem:[#allocation9 + $0xa0] sm:$0xf]
      %v1185 = vld [vmem:[#allocation9 + $0xa4] sm:$0xf]
      %v1186 = vld [vmem:[#allocation9 + $0xa8] sm:$0xf]
      %v1187 = vld [vmem:[#allocation9 + $0xac] sm:$0xf]
      %v1188 = vld [vmem:[#allocation9 + $0xb0] sm:$0xf]
      %v1189 = vld [vmem:[#allocation9 + $0xb4] sm:$0xf]
      %v1190 = vld [vmem:[#allocation9 + $0xb8] sm:$0xf]
      %v1191 = vld [vmem:[#allocation9 + $0xbc] sm:$0xf]
      %v1192 = vld [vmem:[#allocation9 + $0xc0] sm:$0xf]
      %v1193 = vld [vmem:[#allocation9 + $0xc4] sm:$0xf]
      %v1194 = vld [vmem:[#allocation9 + $0xc8] sm:$0xf]
      %v1195 = vld [vmem:[#allocation9 + $0xcc] sm:$0xf]
      %v1196 = vld [vmem:[#allocation9 + $0xd0] sm:$0xf]
      %v1197 = vld [vmem:[#allocation9 + $0xd4] sm:$0xf]
      %v1198 = vld [vmem:[#allocation9 + $0xd8] sm:$0xf]
      %v1199 = vld [vmem:[#allocation9 + $0xdc] sm:$0xf]
      %v1200 = vld [vmem:[#allocation9 + $0xe0] sm:$0xf]
      %v1201 = vld [vmem:[#allocation9 + $0xe4] sm:$0xf]
      %v1202 = vld [vmem:[#allocation9 + $0xe8] sm:$0xf]
      %v1203 = vld [vmem:[#allocation9 + $0xec] sm:$0xf]
      %v1204 = vld [vmem:[#allocation9 + $0xf0] sm:$0xf]
      %v1205 = vld [vmem:[#allocation9 + $0xf4] sm:$0xf]
      %v1206 = vld [vmem:[#allocation9 + $0xf8] sm:$0xf]
      %v1207 = vld [vmem:[#allocation9 + $0xfc] sm:$0xf]
      %v1208 = vld [vmem:[%s6] sm:$0x1]
      %v1210 = vlaneseq
      %v1211 = vshrl.u32 %v1210, 7
      %v1212 = vsub.s32 0, %v1211
      %v1213 = vrot.slane %v1208, %v1212
      %v1279 = vunpack.c.l.b16 %v1144
      %v1280 = vunpack.c.l.b16 %v1145
      %v1281 = vunpack.c.l.b16 %v1146
      %v1282 = vunpack.c.l.b16 %v1147
      %v1283 = vunpack.c.l.b16 %v1148
      %v1284 = vunpack.c.l.b16 %v1149
      %v1285 = vunpack.c.l.b16 %v1150
      %v1286 = vunpack.c.l.b16 %v1151
      %v1287 = vunpack.c.l.b16 %v1152
      %v1288 = vunpack.c.l.b16 %v1153
      %v1289 = vunpack.c.l.b16 %v1154
      %v1290 = vunpack.c.l.b16 %v1155
      %v1291 = vunpack.c.l.b16 %v1156
      %v1292 = vunpack.c.l.b16 %v1157
      %v1293 = vunpack.c.l.b16 %v1158
      %v1294 = vunpack.c.l.b16 %v1159
      %v1295 = vunpack.c.l.b16 %v1160
      %v1296 = vunpack.c.l.b16 %v1161
      %v1297 = vunpack.c.l.b16 %v1162
      %v1298 = vunpack.c.l.b16 %v1163
      %v1299 = vunpack.c.l.b16 %v1164
      %v1300 = vunpack.c.l.b16 %v1165
      %v1301 = vunpack.c.l.b16 %v1166
      %v1302 = vunpack.c.l.b16 %v1167
      %v1303 = vunpack.c.l.b16 %v1168
      %v1304 = vunpack.c.l.b16 %v1169
      %v1305 = vunpack.c.l.b16 %v1170
      %v1306 = vunpack.c.l.b16 %v1171
      %v1307 = vunpack.c.l.b16 %v1172
      %v1308 = vunpack.c.l.b16 %v1173
      %v1309 = vunpack.c.l.b16 %v1174
      %v1310 = vunpack.c.l.b16 %v1175
      %v1311 = vunpack.c.l.b16 %v1176
      %v1312 = vunpack.c.l.b16 %v1177
      %v1313 = vunpack.c.l.b16 %v1178
      %v1314 = vunpack.c.l.b16 %v1179
      %v1315 = vunpack.c.l.b16 %v1180
      %v1316 = vunpack.c.l.b16 %v1181
      %v1317 = vunpack.c.l.b16 %v1182
      %v1318 = vunpack.c.l.b16 %v1183
      %v1319 = vunpack.c.l.b16 %v1184
      %v1320 = vunpack.c.l.b16 %v1185
      %v1321 = vunpack.c.l.b16 %v1186
      %v1322 = vunpack.c.l.b16 %v1187
      %v1323 = vunpack.c.l.b16 %v1188
      %v1324 = vunpack.c.l.b16 %v1189
      %v1325 = vunpack.c.l.b16 %v1190
      %v1326 = vunpack.c.l.b16 %v1191
      %v1327 = vunpack.c.l.b16 %v1192
      %v1328 = vunpack.c.l.b16 %v1193
      %v1329 = vunpack.c.l.b16 %v1194
      %v1330 = vunpack.c.l.b16 %v1195
      %v1331 = vunpack.c.l.b16 %v1196
      %v1332 = vunpack.c.l.b16 %v1197
      %v1333 = vunpack.c.l.b16 %v1198
      %v1334 = vunpack.c.l.b16 %v1199
      %v1335 = vunpack.c.l.b16 %v1200
      %v1336 = vunpack.c.l.b16 %v1201
      %v1337 = vunpack.c.l.b16 %v1202
      %v1338 = vunpack.c.l.b16 %v1203
      %v1339 = vunpack.c.l.b16 %v1204
      %v1340 = vunpack.c.l.b16 %v1205
      %v1341 = vunpack.c.l.b16 %v1206
      %v1342 = vunpack.c.l.b16 %v1207
      %v1343 = vpack.c.b16 %v1280, %v1279
      %v1344 = vpack.c.b16 %v1282, %v1281
      %v1345 = vpack.c.b16 %v1284, %v1283
      %v1346 = vpack.c.b16 %v1286, %v1285
      %v1347 = vpack.c.b16 %v1288, %v1287
      %v1348 = vpack.c.b16 %v1290, %v1289
      %v1349 = vpack.c.b16 %v1292, %v1291
      %v1350 = vpack.c.b16 %v1294, %v1293
      %v1351 = vpack.c.b16 %v1296, %v1295
      %v1352 = vpack.c.b16 %v1298, %v1297
      %v1353 = vpack.c.b16 %v1300, %v1299
      %v1354 = vpack.c.b16 %v1302, %v1301
      %v1355 = vpack.c.b16 %v1304, %v1303
      %v1356 = vpack.c.b16 %v1306, %v1305
      %v1357 = vpack.c.b16 %v1308, %v1307
      %v1358 = vpack.c.b16 %v1310, %v1309
      %v1359 = vpack.c.b16 %v1312, %v1311
      %v1360 = vpack.c.b16 %v1314, %v1313
      %v1361 = vpack.c.b16 %v1316, %v1315
      %v1362 = vpack.c.b16 %v1318, %v1317
      %v1363 = vpack.c.b16 %v1320, %v1319
      %v1364 = vpack.c.b16 %v1322, %v1321
      %v1365 = vpack.c.b16 %v1324, %v1323
      %v1366 = vpack.c.b16 %v1326, %v1325
      %v1367 = vpack.c.b16 %v1328, %v1327
      %v1368 = vpack.c.b16 %v1330, %v1329
      %v1369 = vpack.c.b16 %v1332, %v1331
      %v1370 = vpack.c.b16 %v1334, %v1333
      %v1371 = vpack.c.b16 %v1336, %v1335
      %v1372 = vpack.c.b16 %v1338, %v1337
      %v1373 = vpack.c.b16 %v1340, %v1339
      %v1374 = vpack.c.b16 %v1342, %v1341
      %1407 = vmatprep.subr.bf16.mxu0 0
      %1408 = vmatpush1.bf16.msra.mxu0 %v1343
      %1409 = vmatprep.subr.bf16.mxu0 0
      %1410 = vmatpush1.bf16.msra.mxu0 %v1344
      %1411 = vmatprep.subr.bf16.mxu0 0
      %1412 = vmatpush1.bf16.msra.mxu0 %v1345
      %1413 = vmatprep.subr.bf16.mxu0 0
      %1414 = vmatpush1.bf16.msra.mxu0 %v1346
      %1415 = vmatprep.subr.bf16.mxu0 0
      %1416 = vmatpush1.bf16.msra.mxu0 %v1347
      %1417 = vmatprep.subr.bf16.mxu0 0
      %1418 = vmatpush1.bf16.msra.mxu0 %v1348
      %1419 = vmatprep.subr.bf16.mxu0 0
      %1420 = vmatpush1.bf16.msra.mxu0 %v1349
      %1421 = vmatprep.subr.bf16.mxu0 0
      %1422 = vmatpush1.bf16.msra.mxu0 %v1350
      %1423 = vmatprep.subr.bf16.mxu0 0
      %1424 = vmatpush1.bf16.msra.mxu0 %v1351
      %1425 = vmatprep.subr.bf16.mxu0 0
      %1426 = vmatpush1.bf16.msra.mxu0 %v1352
      %1427 = vmatprep.subr.bf16.mxu0 0
      %1428 = vmatpush1.bf16.msra.mxu0 %v1353
      %1429 = vmatprep.subr.bf16.mxu0 0
      %1430 = vmatpush1.bf16.msra.mxu0 %v1354
      %1431 = vmatprep.subr.bf16.mxu0 0
      %1432 = vmatpush1.bf16.msra.mxu0 %v1355
      %1433 = vmatprep.subr.bf16.mxu0 0
      %1434 = vmatpush1.bf16.msra.mxu0 %v1356
      %1435 = vmatprep.subr.bf16.mxu0 0
      %1436 = vmatpush1.bf16.msra.mxu0 %v1357
      %1437 = vmatprep.subr.bf16.mxu0 0
      %1438 = vmatpush1.bf16.msra.mxu0 %v1358
      %1439 = vmatprep.mubr.bf16.mxu0 %v1141
      %1440 = vmatmul.mubr.bf16.gmra.mrb[0].mxu0 %v1140
      %v1441 = vpop.f32.mrb[0].mxu0
      %v1442 = vadd.f32 %v1213, %v1441
      %v1443 = vpop.f32.mrb[0].mxu0
      %v1444 = vpop.f32.mrb[0].mxu0
      %v1445 = vadd.f32 %v1213, %v1444
      %v1446 = vpop.f32.mrb[0].mxu0
      %1447 = vdwg.mxu0
      %1448 = vmatprep.subr.bf16.mxu0 0
      %1449 = vmatpush1.bf16.msra.mxu0 %v1359
      %1450 = vmatprep.subr.bf16.mxu0 0
      %1451 = vmatpush1.bf16.msra.mxu0 %v1360
      %1452 = vmatprep.subr.bf16.mxu0 0
      %1453 = vmatpush1.bf16.msra.mxu0 %v1361
      %1454 = vmatprep.subr.bf16.mxu0 0
      %1455 = vmatpush1.bf16.msra.mxu0 %v1362
      %1456 = vmatprep.subr.bf16.mxu0 0
      %1457 = vmatpush1.bf16.msra.mxu0 %v1363
      %1458 = vmatprep.subr.bf16.mxu0 0
      %1459 = vmatpush1.bf16.msra.mxu0 %v1364
      %1460 = vmatprep.subr.bf16.mxu0 0
      %1461 = vmatpush1.bf16.msra.mxu0 %v1365
      %1462 = vmatprep.subr.bf16.mxu0 0
      %1463 = vmatpush1.bf16.msra.mxu0 %v1366
      %1464 = vmatprep.subr.bf16.mxu0 0
      %1465 = vmatpush1.bf16.msra.mxu0 %v1367
      %1466 = vmatprep.subr.bf16.mxu0 0
      %1467 = vmatpush1.bf16.msra.mxu0 %v1368
      %1468 = vmatprep.subr.bf16.mxu0 0
      %1469 = vmatpush1.bf16.msra.mxu0 %v1369
      %1470 = vmatprep.subr.bf16.mxu0 0
      %1471 = vmatpush1.bf16.msra.mxu0 %v1370
      %1472 = vmatprep.subr.bf16.mxu0 0
      %1473 = vmatpush1.bf16.msra.mxu0 %v1371
      %1474 = vmatprep.subr.bf16.mxu0 0
      %1475 = vmatpush1.bf16.msra.mxu0 %v1372
      %1476 = vmatprep.subr.bf16.mxu0 0
      %1477 = vmatpush1.bf16.msra.mxu0 %v1373
      %1478 = vmatprep.subr.bf16.mxu0 0
      %1479 = vmatpush1.bf16.msra.mxu0 %v1374
      %1480 = vmatprep.mubr.bf16.mxu0 %v1143
      %1481 = vmatmul.mubr.bf16.gmra.mrb[0].mxu0 %v1142
      %v1482 = vpop.f32.mrb[0].mxu0
      %v1483 = vadd.f32 %v1442, %v1482
      %v1484 = vpop.f32.mrb[0].mxu0
      %v1485 = vpop.f32.mrb[0].mxu0
      %v1486 = vadd.f32 %v1445, %v1485
      %v1487 = vpop.f32.mrb[0].mxu0
      %1488 = vdwg.mxu0
      %1489 = vst [vmem:[#allocation11] sm:$0xff] %v1483
      %1490 = vst [vmem:[#allocation11 + $0x8] sm:$0xff] %v1486
    $region53: #{tpu_custom_call.1} parent=1 // pred_fallthru
      _
    // Predicated region
    $region54: #{tpu_custom_call.1} parent=1 // pred_check
      _
    $region55: #{tpu_custom_call.1} parent=1 // pred_check_branch
      %1492 = sbr.rel (0) target = $region57
    $region56: #{tpu_custom_call.1} parent=1 // pred_region
      %s1494 = ssub.s32 256, 256
      %1495 = vsyncadd [#allocation5], %s1494
      %s1496 = sshll.u32 [#allocation11], 4
      %s1497 = int_to_ptr.vmem [resolvable:$true] %s1496
      %1502 = dma.vmem_to_hbm [thread:$0]  %s1497, 256, %s7, [#allocation5], 128, 128, 8
    $region57: #{tpu_custom_call.1} parent=1 // pred_fallthru
      _
    // Predicated region
    $region58: #{tpu_custom_call.1} parent=1 // pred_check
      _
    $region59: #{tpu_custom_call.1} parent=1 // pred_check_branch
      %1504 = sbr.rel (0) target = $region61
    $region60: #{tpu_custom_call.1} parent=1 // pred_region
      %1505 = dma.done [#allocation5], 256
    $region61: #{tpu_custom_call.1} parent=1 // pred_fallthru
      _
    %1506 = vsyncpa [#allocation4], 1
    %1507 = vsyncpa [#allocation7], 1
    %1508 = vsyncpa [#allocation10], 1
    %1509 = vsyncpa [#allocation5], 1

</llo_original>
